<compile_context>
chip_gen: v6e
topology: v6e:2x2x1
jax: 0.10.0
libtpu: 0.0.40
codegen_flags: <defaults>
</compile_context>

<pallas_src>
import functools

import jax
import jax.numpy as jnp
from jax.experimental import pallas as pl
from jax.experimental.pallas import tpu as pltpu

_LANES = 128
_DEFAULT_BLOCK_ROWS = 512            # 512 * 128 = 65536 batch rows per grid step
_DEFAULT_N_SPLITS = 2                # leading "parallel" axis (v7x: 2 TCs/chip)
_VMEM_INPUT_BUDGET = 12 * 1024 * 1024  # double-buffered input blocks, all gens


def _cdiv(a, b):
    return -(-a // b)


def _round_up(x, m):
    return ((x + m - 1) // m) * m


def _multitask_sse_kernel(*refs, cols, n_tasks):
    """refs = (label_ref, pred_ref_0 .. pred_ref_{T-1}, out_ref, acc_ref).

    label_ref : (C, TBr, 128) f32  label columns, batch on (sublane, lane)
    pred_ref_t: (TBr, 128)    f32  prediction head t, batch on (sublane, lane)
    out_ref   : (1, 128)      f32  lane t = sum of squared errors of task t for
                                   this split's share of the (padded) batch
    acc_ref   : (T, 8, 128)   f32  per-task partial-sum accumulators
    """
    label_ref = refs[0]
    pred_refs = refs[1:1 + n_tasks]
    out_ref = refs[1 + n_tasks]
    acc_ref = refs[2 + n_tasks]

    step = pl.program_id(1)

    @pl.when(step == 0)
    def _init():
        acc_ref[...] = jnp.zeros_like(acc_ref)

    # Load each needed label column once (tasks may share a column).
    lab_cols = {c: label_ref[c] for c in sorted(set(cols))}      # (TBr, 128) each

    # Steady state: pure VALU.  d*d is folded into one (8, 128) vreg per task
    # using static, vreg-aligned slices — no cross-lane/sublane XLU work here.
    for t in range(n_tasks):
        d = pred_refs[t][...] - lab_cols[cols[t]]                # (TBr, 128)
        d2 = d * d
        part = d2[0:8, :]
        for r in range(8, d2.shape[0], 8):
            part = part + d2[r:r + 8, :]
        acc_ref[t] += part

    # All cross-lane/sublane reductions happen exactly once, at finalisation.
    @pl.when(step == pl.num_programs(1) - 1)
    def _finalize():
        lane = jax.lax.broadcasted_iota(jnp.int32, (1, _LANES), 1)
        res = jnp.zeros((1, _LANES), jnp.float32)
        for t in range(n_tasks):
            ss = jnp.sum(acc_ref[t])                             # scalar, once
            res = jnp.where(lane == t, ss, res)
        out_ref[...] = res                                       # one dense store


def multitask_sse_pallas(label3d, preds2d, cols, *, n_splits, block_rows, n_steps):
    """label3d: (C, rows_pad, 128); preds2d: list of (rows_pad, 128) arrays.

    Returns (n_splits, 128) f32; lane t of row s = sum of squared errors of
    task t over split s's share of the zero-padded batch.
    """
    n_tasks = len(preds2d)
    n_cols, rows_pad, _ = label3d.shape
    assert rows_pad == n_splits * n_steps * block_rows

    kernel = functools.partial(
        _multitask_sse_kernel,
        cols=tuple(int(c) for c in cols),
        n_tasks=n_tasks,
    )

    in_specs = [pl.BlockSpec((n_cols, block_rows, _LANES),
                             lambda c, i: (0, c * n_steps + i, 0))]
    in_specs += [pl.BlockSpec((block_rows, _LANES),
                              lambda c, i: (c * n_steps + i, 0))
                 for _ in range(n_tasks)]

    block_bytes = (n_cols + n_tasks) * block_rows * _LANES * 4
    vmem_need = (2 * block_bytes                    # double-buffered inputs
                 + n_tasks * 8 * _LANES * 4         # accumulators
                 + 2 * _LANES * 4)                  # output block
    vmem_limit = int(min(max(2 * vmem_need, 8 << 20), 32 << 20))

    cost = pl.CostEstimate(
        flops=3 * n_tasks * rows_pad * _LANES,
        transcendentals=0,
        bytes_accessed=(n_cols + n_tasks) * rows_pad * _LANES * 4
        + n_splits * _LANES * 4,
    )

    return pl.pallas_call(
        kernel,
        out_shape=jax.ShapeDtypeStruct((n_splits, _LANES), jnp.float32),
        grid_spec=pltpu.PrefetchScalarGridSpec(
            num_scalar_prefetch=0,
            grid=(n_splits, n_steps),
            in_specs=in_specs,
            out_specs=pl.BlockSpec((1, _LANES), lambda c, i: (c, 0)),
            scratch_shapes=[pltpu.VMEM((n_tasks, 8, _LANES), jnp.float32)],
        ),
        compiler_params=pltpu.CompilerParams(
            dimension_semantics=("parallel", "arbitrary"),
            vmem_limit_bytes=vmem_limit,
        ),
        cost_estimate=cost,
    )(label3d, *preds2d)


class MultiTaskLossJAX:
    """Mirror of the PyTorch MultiTaskLoss module (forward pass only)."""

    def __init__(self, training_params, *, pallas_min_batch=65536,
                 block_rows=_DEFAULT_BLOCK_ROWS, n_splits=_DEFAULT_N_SPLITS):
        self.output_names = training_params['output_names']
        self.pallas_min_batch = pallas_min_batch
        self.block_rows = block_rows
        self.n_splits = n_splits
        self.loss_weights = {}
        main_task = self.output_names[0]
        for task in training_params['regressor_names']:
            if main_task in task:
                self.loss_weights[task] = training_params['loss_weights']['main_task']
            else:
                n_aux = len(self.output_names) - 1
                if n_aux == 0:
                    self.loss_weights[task] = 0.0
                else:
                    self.loss_weights[task] = (
                        training_params['loss_weights']['auxillary_task'] / n_aux)

    def _tiling(self, batch, n_cols, n_tasks):
        rows = _cdiv(batch, _LANES)
        n_splits = self.n_splits if rows >= self.n_splits * 8 else 1
        target = max(8, (self.block_rows // 8) * 8)
        # Shrink the tile until double-buffered input blocks fit the VMEM budget.
        while target > 8 and 2 * (n_cols + n_tasks) * target * _LANES * 4 > _VMEM_INPUT_BUDGET:
            target = max(8, ((target // 2) // 8) * 8)
        block_rows = min(target, _round_up(_cdiv(rows, n_splits), 8))
        n_steps = max(1, _cdiv(rows, n_splits * block_rows))
        rows_pad = n_splits * n_steps * block_rows
        return n_splits, block_rows, n_steps, rows_pad

    def __call__(self, output, label):
        # output: dict task -> (B, 1) (or (B,)) array; label: (B, len(output_names)).
        task_names = list(output.keys())
        n_tasks = len(task_names)
        batch, n_cols = label.shape
        cols = [self.output_names.index(name.split('-')[0]) for name in task_names]
        weights = [self.loss_weights[name] for name in task_names]

        use_pallas = (batch >= self.pallas_min_batch) and (0 < n_tasks <= _LANES)
        if not use_pallas:
            # Small / mid problem: let XLA fuse the loss with the upstream heads
            # instead of paying pallas_call launch + grid overhead.
            label_f = label.astype(jnp.float32)
            losses = {}
            for name, c in zip(task_names, cols):
                d = output[name].reshape(batch).astype(jnp.float32) - label_f[:, c]
                losses[name] = jnp.mean(d * d)
            losses['total'] = sum(w * losses[name]
                                  for name, w in zip(task_names, weights))
            return losses

        n_splits, block_rows, n_steps, rows_pad = self._tiling(batch, n_cols, n_tasks)
        batch_pad = rows_pad * _LANES

        # Lane-dense layout: batch on (sublane, lane).  (B,1)->(rows,128) is a
        # free reshape; the label transpose is one cheap pass over B*C*4 bytes.
        # Zero padding (only when B doesn't divide the tile) contributes 0 to
        # the SSE, so no in-kernel masking is required.
        label_t = label.astype(jnp.float32).T                    # (C, B)
        preds = [output[name].reshape(batch).astype(jnp.float32)
                 for name in task_names]                         # (B,)
        if batch_pad != batch:
            pad = batch_pad - batch
            label_t = jnp.pad(label_t, ((0, 0), (0, pad)))
            preds = [jnp.pad(p, (0, pad)) for p in preds]
        label3d = label_t.reshape(n_cols, rows_pad, _LANES)
        preds2d = [p.reshape(rows_pad, _LANES) for p in preds]

        sse = multitask_sse_pallas(label3d, preds2d, cols,
                                   n_splits=n_splits, block_rows=block_rows,
                                   n_steps=n_steps)              # (n_splits, 128)
        sse = jnp.sum(sse, axis=0)                               # combine core splits
        inv_b = 1.0 / batch
        losses = {name: sse[t] * inv_b for t, name in enumerate(task_names)}
        losses['total'] = sum(w * losses[name]
                              for name, w in zip(task_names, weights))
        return losses


if __name__ == "__main__":
    output_names = ['hr', 'rr', 'spo2']
    regressor_names = ['hr', 'hr-aux', 'rr', 'spo2']   # two heads map to the main column
    training_params = {
        'output_names': output_names,
        'regressor_names': regressor_names,
        'device': None,                                # unused in JAX version
        'loss_weights': {'main_task': 1.0, 'auxillary_task': 0.5},
    }

    def make_inputs(key, batch):
        ks = jax.random.split(key, len(regressor_names) + 1)
        output = {name: jax.random.normal(ks[i], (batch, 1), dtype=jnp.float32)
                  for i, name in enumerate(regressor_names)}
        label = jax.random.normal(ks[-1], (batch, len(output_names)),
                                  dtype=jnp.float32)
        return output, label

    def reference(loss_mod, output, label):
        ref = {}
        for name in output:
            col = output_names.index(name.split('-')[0])
            d = output[name].reshape(-1) - label[:, col]
            ref[name] = jnp.mean(d * d)
        ref['total'] = sum(loss_mod.loss_weights[n] * ref[n] for n in output)
        return ref

    def check(losses, ref, tol):
        for n in list(ref.keys()):
            a, b = float(losses[n]), float(ref[n])
            assert abs(a - b) <= tol * max(1.0, abs(b)), (n, a, b)

    # 1) Pallas path, ragged batch (exercises the zero-padding path, 1 split).
    loss_mod = MultiTaskLossJAX(training_params, pallas_min_batch=1)
    out1, lab1 = make_inputs(jax.random.PRNGKey(0), 300)
    l1 = loss_mod(out1, lab1)
    jax.block_until_ready(l1['total'])
    check(l1, reference(loss_mod, out1, lab1), 1e-4)

    # 2) Pallas path, tile-aligned batch (no padding, 2-way parallel split).
    out2, lab2 = make_inputs(jax.random.PRNGKey(1), 4096)
    l2 = loss_mod(out2, lab2)
    jax.block_until_ready(l2['total'])
    check(l2, reference(loss_mod, out2, lab2), 1e-4)

    # 3) Tiny batch -> fused-XLA jnp fallback (default crossover threshold).
    loss_mod_small = MultiTaskLossJAX(training_params)
    out3, lab3 = make_inputs(jax.random.PRNGKey(2), 8)
    l3 = loss_mod_small(out3, lab3)
    jax.block_until_ready(l3['total'])
    check(l3, reference(loss_mod_small, out3, lab3), 1e-5)

    print("KERNEL_OK")
</pallas_src>

<mosaic_0001>
module attributes {stable_mosaic.version = 11 : i64} {
  func.func @_multitask_sse_kernel(%arg0: i32, %arg1: i32, %arg2: memref<3x8x128xf32, #tpu.memory_space<vmem>>, %arg3: memref<8x128xf32, #tpu.memory_space<vmem>>, %arg4: memref<8x128xf32, #tpu.memory_space<vmem>>, %arg5: memref<8x128xf32, #tpu.memory_space<vmem>>, %arg6: memref<8x128xf32, #tpu.memory_space<vmem>>, %arg7: memref<1x128xf32, #tpu.memory_space<vmem>>, %arg8: memref<4x8x128xf32, #tpu.memory_space<vmem>>) attributes {dimension_semantics = [#tpu.dimension_semantics<parallel>, #tpu.dimension_semantics<arbitrary>], iteration_bounds = array<i64: 1, 1>, scalar_prefetch = 0 : i64, scratch_operands = 1 : i64, tpu.core_type = #tpu.core_type<tc>, window_params = [{transform_indices = @transform_0, window_bounds = array<i64: 3, 8, 128>}, {transform_indices = @transform_1, window_bounds = array<i64: 8, 128>}, {transform_indices = @transform_2, window_bounds = array<i64: 8, 128>}, {transform_indices = @transform_3, window_bounds = array<i64: 8, 128>}, {transform_indices = @transform_4, window_bounds = array<i64: 8, 128>}, {transform_indices = @transform_5, window_bounds = array<i64: 1, 128>}]} {
    %c0_i32 = arith.constant 0 : i32
    %0 = arith.cmpi eq, %arg1, %c0_i32 : i32
    %1 = arith.extui %0 : i1 to i32
    %c0_i32_0 = arith.constant 0 : i32
    %2 = arith.cmpi ne, %1, %c0_i32_0 : i32
    scf.if %2 {
      %cst = arith.constant 0.000000e+00 : f32
      %48 = vector.broadcast %cst : f32 to vector<4x8x128xf32>
      %c0_40 = arith.constant 0 : index
      %c0_41 = arith.constant 0 : index
      %c0_42 = arith.constant 0 : index
      %49 = vector.load %arg8[%c0_40, %c0_41, %c0_42] : memref<4x8x128xf32, #tpu.memory_space<vmem>>, vector<4x8x128xf32>
      tpu.vector_store %arg8[%c0_40, %c0_41, %c0_42], %48 {strides = array<i32>} : memref<4x8x128xf32, #tpu.memory_space<vmem>>, vector<4x8x128xf32>,
    } else {
    }
    %c0 = arith.constant 0 : index
    %c0_1 = arith.constant 0 : index
    %c0_2 = arith.constant 0 : index
    %3 = vector.load %arg2[%c0, %c0_1, %c0_2] : memref<3x8x128xf32, #tpu.memory_space<vmem>>, vector<1x8x128xf32>
    %4 = vector.shape_cast %3 : vector<1x8x128xf32> to vector<8x128xf32>
    %c1 = arith.constant 1 : index
    %c0_3 = arith.constant 0 : index
    %c0_4 = arith.constant 0 : index
    %5 = vector.load %arg2[%c1, %c0_3, %c0_4] : memref<3x8x128xf32, #tpu.memory_space<vmem>>, vector<1x8x128xf32>
    %6 = vector.shape_cast %5 : vector<1x8x128xf32> to vector<8x128xf32>
    %c2 = arith.constant 2 : index
    %c0_5 = arith.constant 0 : index
    %c0_6 = arith.constant 0 : index
    %7 = vector.load %arg2[%c2, %c0_5, %c0_6] : memref<3x8x128xf32, #tpu.memory_space<vmem>>, vector<1x8x128xf32>
    %8 = vector.shape_cast %7 : vector<1x8x128xf32> to vector<8x128xf32>
    %c0_7 = arith.constant 0 : index
    %c0_8 = arith.constant 0 : index
    %9 = vector.load %arg3[%c0_7, %c0_8] : memref<8x128xf32, #tpu.memory_space<vmem>>, vector<8x128xf32>
    %10 = arith.subf %9, %4 : vector<8x128xf32>
    %11 = arith.mulf %10, %10 : vector<8x128xf32>
    %c0_9 = arith.constant 0 : index
    %c0_10 = arith.constant 0 : index
    %c0_11 = arith.constant 0 : index
    %12 = vector.load %arg8[%c0_9, %c0_10, %c0_11] : memref<4x8x128xf32, #tpu.memory_space<vmem>>, vector<1x8x128xf32>
    %13 = vector.shape_cast %12 : vector<1x8x128xf32> to vector<8x128xf32>
    %14 = arith.addf %13, %11 : vector<8x128xf32>
    %c0_12 = arith.constant 0 : index
    %c0_13 = arith.constant 0 : index
    %c0_14 = arith.constant 0 : index
    %15 = vector.load %arg8[%c0_12, %c0_13, %c0_14] : memref<4x8x128xf32, #tpu.memory_space<vmem>>, vector<1x8x128xf32>
    %16 = vector.shape_cast %15 : vector<1x8x128xf32> to vector<8x128xf32>
    %17 = vector.shape_cast %14 : vector<8x128xf32> to vector<1x8x128xf32>
    tpu.vector_store %arg8[%c0_12, %c0_13, %c0_14], %17 {strides = array<i32>} : memref<4x8x128xf32, #tpu.memory_space<vmem>>, vector<1x8x128xf32>,
    %c0_15 = arith.constant 0 : index
    %c0_16 = arith.constant 0 : index
    %18 = vector.load %arg4[%c0_15, %c0_16] : memref<8x128xf32, #tpu.memory_space<vmem>>, vector<8x128xf32>
    %19 = arith.subf %18, %4 : vector<8x128xf32>
    %20 = arith.mulf %19, %19 : vector<8x128xf32>
    %c1_17 = arith.constant 1 : index
    %c0_18 = arith.constant 0 : index
    %c0_19 = arith.constant 0 : index
    %21 = vector.load %arg8[%c1_17, %c0_18, %c0_19] : memref<4x8x128xf32, #tpu.memory_space<vmem>>, vector<1x8x128xf32>
    %22 = vector.shape_cast %21 : vector<1x8x128xf32> to vector<8x128xf32>
    %23 = arith.addf %22, %20 : vector<8x128xf32>
    %c1_20 = arith.constant 1 : index
    %c0_21 = arith.constant 0 : index
    %c0_22 = arith.constant 0 : index
    %24 = vector.load %arg8[%c1_20, %c0_21, %c0_22] : memref<4x8x128xf32, #tpu.memory_space<vmem>>, vector<1x8x128xf32>
    %25 = vector.shape_cast %24 : vector<1x8x128xf32> to vector<8x128xf32>
    %26 = vector.shape_cast %23 : vector<8x128xf32> to vector<1x8x128xf32>
    tpu.vector_store %arg8[%c1_20, %c0_21, %c0_22], %26 {strides = array<i32>} : memref<4x8x128xf32, #tpu.memory_space<vmem>>, vector<1x8x128xf32>,
    %c0_23 = arith.constant 0 : index
    %c0_24 = arith.constant 0 : index
    %27 = vector.load %arg5[%c0_23, %c0_24] : memref<8x128xf32, #tpu.memory_space<vmem>>, vector<8x128xf32>
    %28 = arith.subf %27, %6 : vector<8x128xf32>
    %29 = arith.mulf %28, %28 : vector<8x128xf32>
    %c2_25 = arith.constant 2 : index
    %c0_26 = arith.constant 0 : index
    %c0_27 = arith.constant 0 : index
    %30 = vector.load %arg8[%c2_25, %c0_26, %c0_27] : memref<4x8x128xf32, #tpu.memory_space<vmem>>, vector<1x8x128xf32>
    %31 = vector.shape_cast %30 : vector<1x8x128xf32> to vector<8x128xf32>
    %32 = arith.addf %31, %29 : vector<8x128xf32>
    %c2_28 = arith.constant 2 : index
    %c0_29 = arith.constant 0 : index
    %c0_30 = arith.constant 0 : index
    %33 = vector.load %arg8[%c2_28, %c0_29, %c0_30] : memref<4x8x128xf32, #tpu.memory_space<vmem>>, vector<1x8x128xf32>
    %34 = vector.shape_cast %33 : vector<1x8x128xf32> to vector<8x128xf32>
    %35 = vector.shape_cast %32 : vector<8x128xf32> to vector<1x8x128xf32>
    tpu.vector_store %arg8[%c2_28, %c0_29, %c0_30], %35 {strides = array<i32>} : memref<4x8x128xf32, #tpu.memory_space<vmem>>, vector<1x8x128xf32>,
    %c0_31 = arith.constant 0 : index
    %c0_32 = arith.constant 0 : index
    %36 = vector.load %arg6[%c0_31, %c0_32] : memref<8x128xf32, #tpu.memory_space<vmem>>, vector<8x128xf32>
    %37 = arith.subf %36, %8 : vector<8x128xf32>
    %38 = arith.mulf %37, %37 : vector<8x128xf32>
    %c3 = arith.constant 3 : index
    %c0_33 = arith.constant 0 : index
    %c0_34 = arith.constant 0 : index
    %39 = vector.load %arg8[%c3, %c0_33, %c0_34] : memref<4x8x128xf32, #tpu.memory_space<vmem>>, vector<1x8x128xf32>
    %40 = vector.shape_cast %39 : vector<1x8x128xf32> to vector<8x128xf32>
    %41 = arith.addf %40, %38 : vector<8x128xf32>
    %c3_35 = arith.constant 3 : index
    %c0_36 = arith.constant 0 : index
    %c0_37 = arith.constant 0 : index
    %42 = vector.load %arg8[%c3_35, %c0_36, %c0_37] : memref<4x8x128xf32, #tpu.memory_space<vmem>>, vector<1x8x128xf32>
    %43 = vector.shape_cast %42 : vector<1x8x128xf32> to vector<8x128xf32>
    %44 = vector.shape_cast %41 : vector<8x128xf32> to vector<1x8x128xf32>
    tpu.vector_store %arg8[%c3_35, %c0_36, %c0_37], %44 {strides = array<i32>} : memref<4x8x128xf32, #tpu.memory_space<vmem>>, vector<1x8x128xf32>,
    %c0_i32_38 = arith.constant 0 : i32
    %45 = arith.cmpi eq, %arg1, %c0_i32_38 : i32
    %46 = arith.extui %45 : i1 to i32
    %c0_i32_39 = arith.constant 0 : i32
    %47 = arith.cmpi ne, %46, %c0_i32_39 : i32
    scf.if %47 {
      %48 = tpu.iota {dimensions = array<i32: 1>} : vector<1x128xi32>
      %cst = arith.constant 0.000000e+00 : f32
      %49 = vector.broadcast %cst : f32 to vector<1x128xf32>
      %c0_40 = arith.constant 0 : index
      %c0_41 = arith.constant 0 : index
      %c0_42 = arith.constant 0 : index
      %50 = vector.load %arg8[%c0_40, %c0_41, %c0_42] : memref<4x8x128xf32, #tpu.memory_space<vmem>>, vector<1x8x128xf32>
      %51 = vector.shape_cast %50 : vector<1x8x128xf32> to vector<8x128xf32>
      %52 = vector.shape_cast %51 : vector<8x128xf32> to vector<1x8x128xf32>
      %cst_43 = arith.constant dense<0.000000e+00> : vector<1xf32>
      %53 = vector.multi_reduction <add>, %52, %cst_43 [1, 2] : vector<1x8x128xf32> to vector<1xf32>
      %54 = vector.shape_cast %53 : vector<1xf32> to vector<1x1x1xf32>
      %55 = vector.extract %54[0, 0, 0] : f32 from vector<1x1x1xf32>
      %c0_i32_44 = arith.constant 0 : i32
      %56 = vector.broadcast %c0_i32_44 : i32 to vector<1x128xi32>
      %57 = arith.cmpi eq, %48, %56 : vector<1x128xi32>
      %58 = vector.broadcast %55 : f32 to vector<1x128xf32>
      %59 = arith.select %57, %58, %49 : vector<1x128xi1>, vector<1x128xf32>
      %c1_45 = arith.constant 1 : index
      %c0_46 = arith.constant 0 : index
      %c0_47 = arith.constant 0 : index
      %60 = vector.load %arg8[%c1_45, %c0_46, %c0_47] : memref<4x8x128xf32, #tpu.memory_space<vmem>>, vector<1x8x128xf32>
      %61 = vector.shape_cast %60 : vector<1x8x128xf32> to vector<8x128xf32>
      %62 = vector.shape_cast %61 : vector<8x128xf32> to vector<1x8x128xf32>
      %cst_48 = arith.constant dense<0.000000e+00> : vector<1xf32>
      %63 = vector.multi_reduction <add>, %62, %cst_48 [1, 2] : vector<1x8x128xf32> to vector<1xf32>
      %64 = vector.shape_cast %63 : vector<1xf32> to vector<1x1x1xf32>
      %65 = vector.extract %64[0, 0, 0] : f32 from vector<1x1x1xf32>
      %c1_i32 = arith.constant 1 : i32
      %66 = vector.broadcast %c1_i32 : i32 to vector<1x128xi32>
      %67 = arith.cmpi eq, %48, %66 : vector<1x128xi32>
      %68 = vector.broadcast %65 : f32 to vector<1x128xf32>
      %69 = arith.select %67, %68, %59 : vector<1x128xi1>, vector<1x128xf32>
      %c2_49 = arith.constant 2 : index
      %c0_50 = arith.constant 0 : index
      %c0_51 = arith.constant 0 : index
      %70 = vector.load %arg8[%c2_49, %c0_50, %c0_51] : memref<4x8x128xf32, #tpu.memory_space<vmem>>, vector<1x8x128xf32>
      %71 = vector.shape_cast %70 : vector<1x8x128xf32> to vector<8x128xf32>
      %72 = vector.shape_cast %71 : vector<8x128xf32> to vector<1x8x128xf32>
      %cst_52 = arith.constant dense<0.000000e+00> : vector<1xf32>
      %73 = vector.multi_reduction <add>, %72, %cst_52 [1, 2] : vector<1x8x128xf32> to vector<1xf32>
      %74 = vector.shape_cast %73 : vector<1xf32> to vector<1x1x1xf32>
      %75 = vector.extract %74[0, 0, 0] : f32 from vector<1x1x1xf32>
      %c2_i32 = arith.constant 2 : i32
      %76 = vector.broadcast %c2_i32 : i32 to vector<1x128xi32>
      %77 = arith.cmpi eq, %48, %76 : vector<1x128xi32>
      %78 = vector.broadcast %75 : f32 to vector<1x128xf32>
      %79 = arith.select %77, %78, %69 : vector<1x128xi1>, vector<1x128xf32>
      %c3_53 = arith.constant 3 : index
      %c0_54 = arith.constant 0 : index
      %c0_55 = arith.constant 0 : index
      %80 = vector.load %arg8[%c3_53, %c0_54, %c0_55] : memref<4x8x128xf32, #tpu.memory_space<vmem>>, vector<1x8x128xf32>
      %81 = vector.shape_cast %80 : vector<1x8x128xf32> to vector<8x128xf32>
      %82 = vector.shape_cast %81 : vector<8x128xf32> to vector<1x8x128xf32>
      %cst_56 = arith.constant dense<0.000000e+00> : vector<1xf32>
      %83 = vector.multi_reduction <add>, %82, %cst_56 [1, 2] : vector<1x8x128xf32> to vector<1xf32>
      %84 = vector.shape_cast %83 : vector<1xf32> to vector<1x1x1xf32>
      %85 = vector.extract %84[0, 0, 0] : f32 from vector<1x1x1xf32>
      %c3_i32 = arith.constant 3 : i32
      %86 = vector.broadcast %c3_i32 : i32 to vector<1x128xi32>
      %87 = arith.cmpi eq, %48, %86 : vector<1x128xi32>
      %88 = vector.broadcast %85 : f32 to vector<1x128xf32>
      %89 = arith.select %87, %88, %79 : vector<1x128xi1>, vector<1x128xf32>
      %c0_57 = arith.constant 0 : index
      %c0_58 = arith.constant 0 : index
      %90 = vector.load %arg7[%c0_57, %c0_58] : memref<1x128xf32, #tpu.memory_space<vmem>>, vector<1x128xf32>
      tpu.vector_store %arg7[%c0_57, %c0_58], %89 {strides = array<i32>} : memref<1x128xf32, #tpu.memory_space<vmem>>, vector<1x128xf32>,
    } else {
    }
    return
  }
  func.func @transform_0(%arg0: i32, %arg1: i32) -> (i32, i32, i32) {
    %c1_i32 = arith.constant 1 : i32
    %0 = arith.muli %arg0, %c1_i32 : i32
    %1 = arith.addi %0, %arg1 : i32
    %c0_i32 = arith.constant 0 : i32
    %c0_i32_0 = arith.constant 0 : i32
    %c0_i32_1 = arith.constant 0 : i32
    return %c0_i32, %1, %c0_i32_0 : i32, i32, i32
  }
  func.func @transform_1(%arg0: i32, %arg1: i32) -> (i32, i32) {
    %c1_i32 = arith.constant 1 : i32
    %0 = arith.muli %arg0, %c1_i32 : i32
    %1 = arith.addi %0, %arg1 : i32
    %c0_i32 = arith.constant 0 : i32
    %c0_i32_0 = arith.constant 0 : i32
    return %1, %c0_i32 : i32, i32
  }
  func.func @transform_2(%arg0: i32, %arg1: i32) -> (i32, i32) {
    %c1_i32 = arith.constant 1 : i32
    %0 = arith.muli %arg0, %c1_i32 : i32
    %1 = arith.addi %0, %arg1 : i32
    %c0_i32 = arith.constant 0 : i32
    %c0_i32_0 = arith.constant 0 : i32
    return %1, %c0_i32 : i32, i32
  }
  func.func @transform_3(%arg0: i32, %arg1: i32) -> (i32, i32) {
    %c1_i32 = arith.constant 1 : i32
    %0 = arith.muli %arg0, %c1_i32 : i32
    %1 = arith.addi %0, %arg1 : i32
    %c0_i32 = arith.constant 0 : i32
    %c0_i32_0 = arith.constant 0 : i32
    return %1, %c0_i32 : i32, i32
  }
  func.func @transform_4(%arg0: i32, %arg1: i32) -> (i32, i32) {
    %c1_i32 = arith.constant 1 : i32
    %0 = arith.muli %arg0, %c1_i32 : i32
    %1 = arith.addi %0, %arg1 : i32
    %c0_i32 = arith.constant 0 : i32
    %c0_i32_0 = arith.constant 0 : i32
    return %1, %c0_i32 : i32, i32
  }
  func.func @transform_5(%arg0: i32, %arg1: i32) -> (i32, i32) {
    %c0_i32 = arith.constant 0 : i32
    %c0_i32_0 = arith.constant 0 : i32
    return %arg0, %c0_i32 : i32, i32
  }
}

</mosaic_0001>

<llo_original>
// kernel: tpu_custom_call.1
$region0: #{tpu_custom_call.1}
  #allocation0 [shape = 'u32[]', space=smem, size = 0x4, offset = 0x4, fixed_abs, tag = 'smem constant byte address 0x4 - core index']
  #allocation1 [shape = 'u32[144,128]{1,0:T(1,128)}', space=vmem, size = 0x12000, scoped, tag = 'internal scratch']
  #allocation2 [shape = 'f32[4,8,128]{2,1,0:T(8,128)}', space=vmem, size = 0x4000, scoped, tag = 'scratch operand']
  %s0 = inlined_call_operand.hbm [shape: f32[3,8,128], index: 0, kind: input, shape index: {}]
  %s1 = inlined_call_operand.hbm [shape: f32[8,128], index: 1, kind: input, shape index: {}]
  %s2 = inlined_call_operand.hbm [shape: f32[8,128], index: 2, kind: input, shape index: {}]
  %s3 = inlined_call_operand.hbm [shape: f32[8,128], index: 3, kind: input, shape index: {}]
  %s4 = inlined_call_operand.hbm [shape: f32[8,128], index: 4, kind: input, shape index: {}]
  %s5 = inlined_call_operand.hbm [shape: f32[1,128], index: 5, kind: output, shape index: {}]
  %s6 = sld [smem:[#allocation0]]
  $region58: #{tpu_custom_call.1} parent=0
    _
  %s8 = ssub.s32 1, %s6
  %s9 = scalar_select 0, %s8, %s6
  $region1: #{tpu_custom_call.1} parent=0
    #allocation3 [shape = 'u8[12288]{0}', space=vmem, size = 0x3000, scoped, tag = 'input window, operand 0, single buffered']
    #allocation4 [shape = 's32[1]{0}', space=sflag, size = 0x4, scoped, tag = 'scoped memory for tpu_custom_call.1']
    #allocation5 [shape = 's32[1]{0}', space=sflag, size = 0x4, scoped, tag = 'scoped memory for tpu_custom_call.1']
    #allocation6 [shape = 'u8[4096]{0}', space=vmem, size = 0x1000, scoped, tag = 'input window, operand 1, single buffered']
    #allocation7 [shape = 's32[1]{0}', space=sflag, size = 0x4, scoped, tag = 'scoped memory for tpu_custom_call.1']
    #allocation8 [shape = 'u8[4096]{0}', space=vmem, size = 0x1000, scoped, tag = 'input window, operand 2, single buffered']
    #allocation9 [shape = 'u8[4096]{0}', space=vmem, size = 0x1000, scoped, tag = 'input window, operand 3, single buffered']
    #allocation10 [shape = 's32[1]{0}', space=sflag, size = 0x4, scoped, tag = 'scoped memory for tpu_custom_call.1']
    #allocation11 [shape = 'u8[4096]{0}', space=vmem, size = 0x1000, scoped, tag = 'input window, operand 4, single buffered']
    #allocation12 [shape = 'u8[512]{0}', space=vmem, size = 0x400, scoped, tag = 'output window, operand 0, single buffered']
    %10 = vsyncpa [#allocation4], 0
    %11 = vsyncpa [#allocation7], 0
    %12 = vsyncpa [#allocation10], 0
    %13 = vsyncpa [#allocation5], 0
    // Predicated region
    $region2: #{tpu_custom_call.1} parent=1 // pred_check
      _
    $region3: #{tpu_custom_call.1} parent=1 // pred_check_branch
      %15 = sbr.rel (0) target = $region5
    $region4: #{tpu_custom_call.1} parent=1 // pred_region
      %s16 = sadd.s32 0, 0
      %s18 = ssub.s32 384, 384
      %19 = vsyncadd [#allocation4], %s18
      %s20 = smul.addr %s16, 128
      %s21 = scalar_lea.hbm %s0, %s20
      %s22 = sshll.u32 [#allocation3], 4
      %s23 = int_to_ptr.vmem [resolvable:$true] %s22
      %28 = dma.hbm_to_vmem [thread:$0]  %s21, 384, %s23, [#allocation4], 128, 128, 8
    $region5: #{tpu_custom_call.1} parent=1 // pred_fallthru
      _
    // Predicated region
    $region6: #{tpu_custom_call.1} parent=1 // pred_check
      _
    $region7: #{tpu_custom_call.1} parent=1 // pred_check_branch
      %30 = sbr.rel (0) target = $region9
    $region8: #{tpu_custom_call.1} parent=1 // pred_region
      %s31 = sadd.s32 0, 0
      %s33 = ssub.s32 128, 128
      %34 = vsyncadd [#allocation7], %s33
      %s35 = smul.addr %s31, 128
      %s36 = scalar_lea.hbm %s1, %s35
      %s38 = sshll.u32 [#allocation6], 4
      %s39 = int_to_ptr.vmem [resolvable:$true] %s38
      %41 = dma.hbm_to_vmem [thread:$0]  %s36, 128, %s39, [#allocation7]
    $region9: #{tpu_custom_call.1} parent=1 // pred_fallthru
      _
    // Predicated region
    $region10: #{tpu_custom_call.1} parent=1 // pred_check
      _
    $region11: #{tpu_custom_call.1} parent=1 // pred_check_branch
      %43 = sbr.rel (0) target = $region13
    $region12: #{tpu_custom_call.1} parent=1 // pred_region
      %s44 = sadd.s32 0, 0
      %s46 = ssub.s32 128, 128
      %47 = vsyncadd [#allocation7], %s46
      %s48 = smul.addr %s44, 128
      %s49 = scalar_lea.hbm %s2, %s48
      %s51 = sshll.u32 [#allocation8], 4
      %s52 = int_to_ptr.vmem [resolvable:$true] %s51
      %54 = dma.hbm_to_vmem [thread:$0]  %s49, 128, %s52, [#allocation7]
    $region13: #{tpu_custom_call.1} parent=1 // pred_fallthru
      _
    // Predicated region
    $region14: #{tpu_custom_call.1} parent=1 // pred_check
      _
    $region15: #{tpu_custom_call.1} parent=1 // pred_check_branch
      %56 = sbr.rel (0) target = $region17
    $region16: #{tpu_custom_call.1} parent=1 // pred_region
      %s57 = sadd.s32 0, 0
      %s59 = ssub.s32 128, 128
      %60 = vsyncadd [#allocation10], %s59
      %s61 = smul.addr %s57, 128
      %s62 = scalar_lea.hbm %s3, %s61
      %s64 = sshll.u32 [#allocation9], 4
      %s65 = int_to_ptr.vmem [resolvable:$true] %s64
      %67 = dma.hbm_to_vmem [thread:$0]  %s62, 128, %s65, [#allocation10]
    $region17: #{tpu_custom_call.1} parent=1 // pred_fallthru
      _
    // Predicated region
    $region18: #{tpu_custom_call.1} parent=1 // pred_check
      _
    $region19: #{tpu_custom_call.1} parent=1 // pred_check_branch
      %69 = sbr.rel (0) target = $region21
    $region20: #{tpu_custom_call.1} parent=1 // pred_region
      %s70 = sadd.s32 0, 0
      %s72 = ssub.s32 128, 128
      %73 = vsyncadd [#allocation10], %s72
      %s74 = smul.addr %s70, 128
      %s75 = scalar_lea.hbm %s4, %s74
      %s77 = sshll.u32 [#allocation11], 4
      %s78 = int_to_ptr.vmem [resolvable:$true] %s77
      %80 = dma.hbm_to_vmem [thread:$0]  %s75, 128, %s78, [#allocation10]
    $region21: #{tpu_custom_call.1} parent=1 // pred_fallthru
      _
    // Predicated region
    $region22: #{tpu_custom_call.1} parent=1 // pred_check
      _
    $region23: #{tpu_custom_call.1} parent=1 // pred_check_branch
      %82 = sbr.rel (0) target = $region25
    $region24: #{tpu_custom_call.1} parent=1 // pred_region
      %83 = dma.done [#allocation4], 384
    $region25: #{tpu_custom_call.1} parent=1 // pred_fallthru
      _
    // Predicated region
    $region26: #{tpu_custom_call.1} parent=1 // pred_check
      _
    $region27: #{tpu_custom_call.1} parent=1 // pred_check_branch
      %85 = sbr.rel (0) target = $region29
    $region28: #{tpu_custom_call.1} parent=1 // pred_region
      %86 = dma.done [#allocation7], 128
    $region29: #{tpu_custom_call.1} parent=1 // pred_fallthru
      _
    // Predicated region
    $region30: #{tpu_custom_call.1} parent=1 // pred_check
      _
    $region31: #{tpu_custom_call.1} parent=1 // pred_check_branch
      %88 = sbr.rel (0) target = $region33
    $region32: #{tpu_custom_call.1} parent=1 // pred_region
      %89 = dma.done [#allocation7], 128
    $region33: #{tpu_custom_call.1} parent=1 // pred_fallthru
      _
    // Predicated region
    $region34: #{tpu_custom_call.1} parent=1 // pred_check
      _
    $region35: #{tpu_custom_call.1} parent=1 // pred_check_branch
      %91 = sbr.rel (0) target = $region37
    $region36: #{tpu_custom_call.1} parent=1 // pred_region
      %92 = dma.done [#allocation10], 128
    $region37: #{tpu_custom_call.1} parent=1 // pred_fallthru
      _
    // Predicated region
    $region38: #{tpu_custom_call.1} parent=1 // pred_check
      _
    $region39: #{tpu_custom_call.1} parent=1 // pred_check_branch
      %94 = sbr.rel (0) target = $region41
    $region40: #{tpu_custom_call.1} parent=1 // pred_region
      %95 = dma.done [#allocation10], 128
    $region41: #{tpu_custom_call.1} parent=1 // pred_fallthru
      _
    %s96 = sadd.s32 0, 0
    %s97 = sadd.s32 0, 0
    %s98 = sadd.s32 0, 0
    %s99 = sadd.s32 0, 0
    %s100 = sadd.s32 0, 0
    %p101 = scmp.eq.s32.totalorder 0, 0
    // Predicated region
    $region42: #{tpu_custom_call.1} parent=1 // pred_check
      %p102 = pneg %p101
    $region43: #{tpu_custom_call.1} parent=1 // pred_check_branch
      %104 = sbr.rel (%p102) target = $region45
    $region44: #{tpu_custom_call.1} parent=1 // pred_region
      %105 = vst [vmem:[#allocation2] sm:$0xff] 0.0
      %106 = vst [vmem:[#allocation2 + $0x8] sm:$0xff] 0.0
      %107 = vst [vmem:[#allocation2 + $0x10] sm:$0xff] 0.0
      %108 = vst [vmem:[#allocation2 + $0x18] sm:$0xff] 0.0
    $region45: #{tpu_custom_call.1} parent=1 // pred_fallthru
      _
    %v109 = vld [vmem:[#allocation3] sm:$0xff]
    %s110 = scalar_lea.vmem [#allocation3], 8
    %v111 = vld [vmem:[%s110] sm:$0xff]
    %s112 = scalar_lea.vmem [#allocation3], 16
    %v113 = vld [vmem:[%s112] sm:$0xff]
    %v114 = vld [vmem:[#allocation6] sm:$0xff]
    %v115 = vsub.f32 %v114, %v109
    %v116 = vmul.f32 %v115, %v115
    %v117 = vld [vmem:[#allocation2] sm:$0xff]
    %v118 = vadd.f32 %v117, %v116
    %119 = vst [vmem:[#allocation2] sm:$0xff] %v118
    %v120 = vld [vmem:[#allocation8] sm:$0xff]
    %v121 = vsub.f32 %v120, %v109
    %v122 = vmul.f32 %v121, %v121
    %s123 = scalar_lea.vmem [#allocation2], 8
    %v124 = vld [vmem:[%s123] sm:$0xff]
    %v125 = vadd.f32 %v124, %v122
    %126 = vst [vmem:[%s123] sm:$0xff] %v125
    %v127 = vld [vmem:[#allocation9] sm:$0xff]
    %v128 = vsub.f32 %v127, %v111
    %v129 = vmul.f32 %v128, %v128
    %s130 = scalar_lea.vmem [#allocation2], 16
    %v131 = vld [vmem:[%s130] sm:$0xff]
    %v132 = vadd.f32 %v131, %v129
    %133 = vst [vmem:[%s130] sm:$0xff] %v132
    %v134 = vld [vmem:[#allocation11] sm:$0xff]
    %v135 = vsub.f32 %v134, %v113
    %v136 = vmul.f32 %v135, %v135
    %s137 = scalar_lea.vmem [#allocation2], 24
    %v138 = vld [vmem:[%s137] sm:$0xff]
    %v139 = vadd.f32 %v138, %v136
    %140 = vst [vmem:[%s137] sm:$0xff] %v139
    // Predicated region
    $region46: #{tpu_custom_call.1} parent=1 // pred_check
      %p141 = pneg %p101
    $region47: #{tpu_custom_call.1} parent=1 // pred_check_branch
      %143 = sbr.rel (%p141) target = $region49
    $region48: #{tpu_custom_call.1} parent=1 // pred_region
      %v144 = vlaneseq
      %v145 = vand.u32 %v144, 127
      %v146 = vld [vmem:[#allocation2] sm:$0xff]
      %147 = vadd.xlane.f32.xlu0 %v146
      %v148 = vpop.xlane.xlu0 %147
      %v149 = vrot.slane %v148, 4
      %v150 = vadd.f32 %v148, %v149
      %v151 = vrot.slane %v150, 2
      %v152 = vadd.f32 %v150, %v151
      %v153 = vrot.slane %v152, 1
      %v154 = vadd.f32 %v152, %v153
      %s155 = vtos %v154
      %vm156 = vcmp.eq.s32.totalorder %v145, 0
      %v157 = vstv %s155
      %v158 = vsel %vm156, %v157, 0.0
      %v159 = vld [vmem:[%s123] sm:$0xff]
      %160 = vadd.xlane.f32.xlu0 %v159
      %v161 = vpop.xlane.xlu0 %160
      %v162 = vrot.slane %v161, 4
      %v163 = vadd.f32 %v161, %v162
      %v164 = vrot.slane %v163, 2
      %v165 = vadd.f32 %v163, %v164
      %v166 = vrot.slane %v165, 1
      %v167 = vadd.f32 %v165, %v166
      %s168 = vtos %v167
      %vm169 = vcmp.eq.s32.totalorder %v145, 1
      %v170 = vstv %s168
      %v171 = vsel %vm169, %v170, %v158
      %v172 = vld [vmem:[%s130] sm:$0xff]
      %173 = vadd.xlane.f32.xlu0 %v172
      %v174 = vpop.xlane.xlu0 %173
      %v175 = vrot.slane %v174, 4
      %v176 = vadd.f32 %v174, %v175
      %v177 = vrot.slane %v176, 2
      %v178 = vadd.f32 %v176, %v177
      %v179 = vrot.slane %v178, 1
      %v180 = vadd.f32 %v178, %v179
      %s181 = vtos %v180
      %vm182 = vcmp.eq.s32.totalorder %v145, 2
      %v183 = vstv %s181
      %v184 = vsel %vm182, %v183, %v171
      %v185 = vld [vmem:[%s137] sm:$0xff]
      %186 = vadd.xlane.f32.xlu0 %v185
      %v187 = vpop.xlane.xlu0 %186
      %v188 = vrot.slane %v187, 4
      %v189 = vadd.f32 %v187, %v188
      %v190 = vrot.slane %v189, 2
      %v191 = vadd.f32 %v189, %v190
      %v192 = vrot.slane %v191, 1
      %v193 = vadd.f32 %v191, %v192
      %s194 = vtos %v193
      %vm195 = vcmp.eq.s32.totalorder %v145, 3
      %v196 = vstv %s194
      %v197 = vsel %vm195, %v196, %v184
      %198 = vst [vmem:[#allocation12] sm:$0x1] %v197
    $region49: #{tpu_custom_call.1} parent=1 // pred_fallthru
      _
    // Predicated region
    $region50: #{tpu_custom_call.1} parent=1 // pred_check
      _
    $region51: #{tpu_custom_call.1} parent=1 // pred_check_branch
      %200 = sbr.rel (0) target = $region53
    $region52: #{tpu_custom_call.1} parent=1 // pred_region
      %s202 = ssub.s32 16, 16
      %203 = vsyncadd [#allocation5], %s202
      %s205 = sshll.u32 [#allocation12], 4
      %s206 = int_to_ptr.vmem [resolvable:$true] %s205
      %208 = dma.vmem_to_hbm [thread:$0]  %s206, 16, %s5, [#allocation5]
    $region53: #{tpu_custom_call.1} parent=1 // pred_fallthru
      _
    // Predicated region
    $region54: #{tpu_custom_call.1} parent=1 // pred_check
      _
    $region55: #{tpu_custom_call.1} parent=1 // pred_check_branch
      %210 = sbr.rel (0) target = $region57
    $region56: #{tpu_custom_call.1} parent=1 // pred_region
      %211 = dma.done [#allocation5], 16
    $region57: #{tpu_custom_call.1} parent=1 // pred_fallthru
      _
    %212 = vsyncpa [#allocation4], 1
    %213 = vsyncpa [#allocation7], 1
    %214 = vsyncpa [#allocation10], 1
    %215 = vsyncpa [#allocation5], 1

</llo_original>
